<compile_context>
chip_gen: v7x
topology: tpu7x:2x2x1
jax: 0.10.0
libtpu: 0.0.40
codegen_flags: <defaults>
</compile_context>

<pallas_src>
import jax
import jax.numpy as jnp
from jax import lax
from jax.experimental import pallas as pl
from jax.experimental.pallas import tpu as pltpu


# --------------------------------------------------------------------------
# Kernel
# --------------------------------------------------------------------------
def _shortcut_kernel(x_ref, w1_ref, b1_ref, w2_ref, b2_ref, out_ref):
    """One batch-block per grid step, packed channels-last layout.

    x_ref  : (Bblk, H, W*C)     input images, lane dim = W*C
    w*_ref : (3*W*C, W*C)       banded packed conv weights (dy-major rows)
    b*_ref : (1, W*C)           packed conv biases
    out_ref: (Bblk, H, W*C)
    """
    bblk, H, WC = x_ref.shape
    M = bblk * H

    x = x_ref[...].reshape(M, WC).astype(jnp.float32)         # (M, WC)

    # Per-image row index (no modulo needed: iota over the H axis, then flatten).
    h_idx = lax.broadcasted_iota(jnp.int32, (bblk, H, WC), 1).reshape(M, WC)
    top = h_idx == 0            # dy = -1 tap falls outside the image
    bottom = h_idx == H - 1     # dy = +1 tap falls outside the image

    def shifted_k(src):
        # Build the (M, 3*WC) operand [src[h-1], src[h], src[h+1]] with the
        # out-of-image rows zeroed (conv pad=1).  Rolls use the XLU slot.
        up = jnp.where(top, 0.0, pltpu.roll(src, 1, 0))          # src[h-1]
        dn = jnp.where(bottom, 0.0, pltpu.roll(src, M - 1, 0))   # src[h+1]
        return jnp.concatenate([up, src, dn], axis=1)            # (M, 3*WC)

    def conv3x3(src, w_ref, b_ref):
        xk = shifted_k(src)
        acc = jnp.dot(xk, w_ref[...].astype(jnp.float32),
                      preferred_element_type=jnp.float32)        # (M, WC)
        return acc + b_ref[...].astype(jnp.float32)              # (1,WC) bcast

    y = jnp.maximum(conv3x3(x, w1_ref, b1_ref), 0.0)   # conv1 + bias + ReLU
    y = conv3x3(y, w2_ref, b2_ref)                     # conv2 + bias
    out = (x + y).reshape(bblk, H, WC)                 # shortcut: x + sub(x)
    out_ref[...] = out.astype(out_ref.dtype)


# --------------------------------------------------------------------------
# Wrapper helpers
# --------------------------------------------------------------------------
def _band_pack(w, W, C):
    """(3, 3, Cin, Cout) conv weight -> (3*W*C, W*C) banded matmul weight.

    out[ky*W*C + u*C + i, v*C + o] = w[ky, (u - v) + 1, i, o]  if |u - v| <= 1
                                   = 0                          otherwise
    Zero-padding at the left/right image edges falls out of the band structure.
    """
    u = jnp.arange(W)[:, None]
    v = jnp.arange(W)[None, :]
    d = u - v + 1                                        # kx index, valid in [0,2]
    valid = ((d >= 0) & (d <= 2)).astype(w.dtype)        # (W, W)
    sel = w[:, jnp.clip(d, 0, 2)]                        # (3, W, W, Cin, Cout)
    sel = sel * valid[None, :, :, None, None]
    # (ky, u, v, i, o) -> (ky, u, i, v, o) -> (3*W*C, W*C)
    return sel.transpose(0, 1, 3, 2, 4).reshape(3 * W * C, W * C)


def _pick_batch_block(B, H, target_rows=256):
    """Largest divisor of B with Bblk*H ~<= target_rows, keeping grid >= 2."""
    max_blk = max(1, target_rows // max(H, 1))
    if B >= 2:                       # v7x: 2 TensorCores -> keep >= 2 grid steps
        max_blk = min(max_blk, B // 2)
    max_blk = max(1, min(max_blk, B))
    best = 1
    for d in range(1, max_blk + 1):
        if B % d == 0:
            best = d
    return best


def shortcut_block_packed(x, w1p, b1p, w2p, b2p, *, batch_block=None):
    """Packed-layout entry point.  x: (B, H, W*C); weights already band-packed."""
    B, H, WC = x.shape
    bblk = batch_block or _pick_batch_block(B, H)
    assert B % bblk == 0
    grid = (B // bblk,)

    return pl.pallas_call(
        _shortcut_kernel,
        out_shape=jax.ShapeDtypeStruct((B, H, WC), x.dtype),
        grid_spec=pltpu.PrefetchScalarGridSpec(
            num_scalar_prefetch=0,
            grid=grid,
            in_specs=[
                pl.BlockSpec((bblk, H, WC), lambda b: (b, 0, 0)),
                pl.BlockSpec((3 * WC, WC), lambda b: (0, 0)),
                pl.BlockSpec((1, WC), lambda b: (0, 0)),
                pl.BlockSpec((3 * WC, WC), lambda b: (0, 0)),
                pl.BlockSpec((1, WC), lambda b: (0, 0)),
            ],
            out_specs=pl.BlockSpec((bblk, H, WC), lambda b: (b, 0, 0)),
        ),
        compiler_params=pltpu.CompilerParams(
            dimension_semantics=("parallel",),
            vmem_limit_bytes=32 * 1024 * 1024),
    )(x, w1p, b1p, w2p, b2p)


def shortcut_block(x_nchw, w1, b1, w2, b2):
    """NCHW convenience wrapper matching the PyTorch convention.

    x_nchw: (B, C, H, W); conv weights (3, 3, Cin, Cout); biases (C,).
    For chained blocks prefer shortcut_block_packed to keep the (B, H, W*C)
    layout resident and avoid the HBM transpose passes here.
    """
    B, C, H, W = x_nchw.shape
    WC = W * C

    # Channels-last, lane-packed layout (B, H, W*C).
    x = jnp.transpose(x_nchw, (0, 2, 3, 1)).reshape(B, H, WC)

    w1p = _band_pack(w1, W, C)
    w2p = _band_pack(w2, W, C)
    b1p = jnp.tile(b1, W).reshape(1, WC)
    b2p = jnp.tile(b2, W).reshape(1, WC)

    out = shortcut_block_packed(x, w1p, b1p, w2p, b2p)

    # Unpack back to NCHW.
    return jnp.transpose(out.reshape(B, H, W, C), (0, 3, 1, 2))


# --------------------------------------------------------------------------
# Reference + test
# --------------------------------------------------------------------------
def _reference(x_nchw, w1, b1, w2, b2):
    """Pure-JAX reference (lax.conv) for the correctness check."""
    def conv(x, w, b):
        w_oihw = jnp.transpose(w, (3, 2, 0, 1))   # (kh,kw,Cin,Cout) -> OIHW
        y = lax.conv_general_dilated(
            x, w_oihw, window_strides=(1, 1), padding=((1, 1), (1, 1)),
            dimension_numbers=("NCHW", "OIHW", "NCHW"))
        return y + b[None, :, None, None]

    y = jax.nn.relu(conv(x_nchw, w1, b1))
    y = conv(y, w2, b2)
    return x_nchw + y


if __name__ == "__main__":
    B, C, H, W = 2, 8, 16, 16   # W*C = 128 -> fully lane-dense packed layout

    key = jax.random.PRNGKey(0)
    kx, k1, k2, kb1, kb2 = jax.random.split(key, 5)

    x = jax.random.normal(kx, (B, C, H, W), dtype=jnp.float32)
    fan_in = 3 * 3 * C
    w1 = jax.random.normal(k1, (3, 3, C, C), dtype=jnp.float32) / jnp.sqrt(fan_in)
    w2 = jax.random.normal(k2, (3, 3, C, C), dtype=jnp.float32) / jnp.sqrt(fan_in)
    b1 = jax.random.normal(kb1, (C,), dtype=jnp.float32) * 0.01
    b2 = jax.random.normal(kb2, (C,), dtype=jnp.float32) * 0.01

    out = shortcut_block(x, w1, b1, w2, b2)
    out = jax.block_until_ready(out)

    ref = _reference(x, w1, b1, w2, b2)
    assert out.shape == (B, C, H, W)
    assert jnp.allclose(out, ref, atol=1e-4, rtol=1e-4), \
        f"max abs err = {jnp.max(jnp.abs(out - ref))}"

    print("KERNEL_OK")
</pallas_src>

<mosaic_0001>
module attributes {stable_mosaic.version = 11 : i64} {
  func.func @_shortcut_kernel(%arg0: i32, %arg1: memref<1x16x128xf32, #tpu.memory_space<vmem>>, %arg2: memref<384x128xf32, #tpu.memory_space<vmem>>, %arg3: memref<1x128xf32, #tpu.memory_space<vmem>>, %arg4: memref<384x128xf32, #tpu.memory_space<vmem>>, %arg5: memref<1x128xf32, #tpu.memory_space<vmem>>, %arg6: memref<1x16x128xf32, #tpu.memory_space<vmem>>) attributes {dimension_semantics = [#tpu.dimension_semantics<parallel>], iteration_bounds = array<i64: 2>, scalar_prefetch = 0 : i64, scratch_operands = 0 : i64, tpu.core_type = #tpu.core_type<tc>, window_params = [{transform_indices = @transform_0, window_bounds = array<i64: 1, 16, 128>}, {pipeline_mode = #tpu.pipeline_mode<synchronous>, transform_indices = @transform_1, window_bounds = array<i64: 384, 128>}, {pipeline_mode = #tpu.pipeline_mode<synchronous>, transform_indices = @transform_2, window_bounds = array<i64: 1, 128>}, {pipeline_mode = #tpu.pipeline_mode<synchronous>, transform_indices = @transform_3, window_bounds = array<i64: 384, 128>}, {pipeline_mode = #tpu.pipeline_mode<synchronous>, transform_indices = @transform_4, window_bounds = array<i64: 1, 128>}, {transform_indices = @transform_5, window_bounds = array<i64: 1, 16, 128>}]} {
    %c0 = arith.constant 0 : index
    %c0_0 = arith.constant 0 : index
    %c0_1 = arith.constant 0 : index
    %0 = vector.load %arg1[%c0, %c0_0, %c0_1] : memref<1x16x128xf32, #tpu.memory_space<vmem>>, vector<1x16x128xf32>
    %1 = vector.shape_cast %0 : vector<1x16x128xf32> to vector<16x128xf32>
    %2 = tpu.iota {dimensions = array<i32: 1>} : vector<1x16x128xi32>
    %3 = vector.shape_cast %2 : vector<1x16x128xi32> to vector<16x128xi32>
    %c0_i32 = arith.constant 0 : i32
    %4 = vector.broadcast %c0_i32 : i32 to vector<16x128xi32>
    %5 = arith.cmpi eq, %3, %4 : vector<16x128xi32>
    %c15_i32 = arith.constant 15 : i32
    %6 = vector.broadcast %c15_i32 : i32 to vector<16x128xi32>
    %7 = arith.cmpi eq, %3, %6 : vector<16x128xi32>
    %c1_i32 = arith.constant 1 : i32
    %8 = tpu.dynamic_rotate %1 by %c1_i32 dim 0 : vector<16x128xf32>, i32 -> vector<16x128xf32>
    %cst = arith.constant 0.000000e+00 : f32
    %9 = vector.broadcast %cst : f32 to vector<16x128xf32>
    %10 = arith.select %5, %9, %8 : vector<16x128xi1>, vector<16x128xf32>
    %c15_i32_2 = arith.constant 15 : i32
    %11 = tpu.dynamic_rotate %1 by %c15_i32_2 dim 0 : vector<16x128xf32>, i32 -> vector<16x128xf32>
    %cst_3 = arith.constant 0.000000e+00 : f32
    %12 = vector.broadcast %cst_3 : f32 to vector<16x128xf32>
    %13 = arith.select %7, %12, %11 : vector<16x128xi1>, vector<16x128xf32>
    %14 = tpu.concatenate %10, %1, %13 in 1 : vector<16x128xf32>, vector<16x128xf32>, vector<16x128xf32> -> vector<16x384xf32>
    %c0_4 = arith.constant 0 : index
    %c0_5 = arith.constant 0 : index
    %15 = vector.load %arg2[%c0_4, %c0_5] : memref<384x128xf32, #tpu.memory_space<vmem>>, vector<384x128xf32>
    %cst_6 = arith.constant dense<0.000000e+00> : vector<16x128xf32>
    %16 = tpu.matmul %14, %15, %cst_6 {dimension_numbers = #tpu.dot_dimension_numbers<[1], [0], [0], [1], [0, 0, 1, 1], [], []>} : vector<16x384xf32>, vector<384x128xf32>, vector<16x128xf32> -> vector<16x128xf32>
    %c0_7 = arith.constant 0 : index
    %c0_8 = arith.constant 0 : index
    %17 = vector.load %arg3[%c0_7, %c0_8] : memref<1x128xf32, #tpu.memory_space<vmem>>, vector<1x128xf32>
    %18 = vector.broadcast %17 : vector<1x128xf32> to vector<16x128xf32>
    %19 = arith.addf %16, %18 : vector<16x128xf32>
    %cst_9 = arith.constant 0.000000e+00 : f32
    %20 = vector.broadcast %cst_9 : f32 to vector<16x128xf32>
    %21 = arith.maximumf %19, %20 : vector<16x128xf32>
    %c1_i32_10 = arith.constant 1 : i32
    %22 = tpu.dynamic_rotate %21 by %c1_i32_10 dim 0 : vector<16x128xf32>, i32 -> vector<16x128xf32>
    %cst_11 = arith.constant 0.000000e+00 : f32
    %23 = vector.broadcast %cst_11 : f32 to vector<16x128xf32>
    %24 = arith.select %5, %23, %22 : vector<16x128xi1>, vector<16x128xf32>
    %c15_i32_12 = arith.constant 15 : i32
    %25 = tpu.dynamic_rotate %21 by %c15_i32_12 dim 0 : vector<16x128xf32>, i32 -> vector<16x128xf32>
    %cst_13 = arith.constant 0.000000e+00 : f32
    %26 = vector.broadcast %cst_13 : f32 to vector<16x128xf32>
    %27 = arith.select %7, %26, %25 : vector<16x128xi1>, vector<16x128xf32>
    %28 = tpu.concatenate %24, %21, %27 in 1 : vector<16x128xf32>, vector<16x128xf32>, vector<16x128xf32> -> vector<16x384xf32>
    %c0_14 = arith.constant 0 : index
    %c0_15 = arith.constant 0 : index
    %29 = vector.load %arg4[%c0_14, %c0_15] : memref<384x128xf32, #tpu.memory_space<vmem>>, vector<384x128xf32>
    %cst_16 = arith.constant dense<0.000000e+00> : vector<16x128xf32>
    %30 = tpu.matmul %28, %29, %cst_16 {dimension_numbers = #tpu.dot_dimension_numbers<[1], [0], [0], [1], [0, 0, 1, 1], [], []>} : vector<16x384xf32>, vector<384x128xf32>, vector<16x128xf32> -> vector<16x128xf32>
    %c0_17 = arith.constant 0 : index
    %c0_18 = arith.constant 0 : index
    %31 = vector.load %arg5[%c0_17, %c0_18] : memref<1x128xf32, #tpu.memory_space<vmem>>, vector<1x128xf32>
    %32 = vector.broadcast %31 : vector<1x128xf32> to vector<16x128xf32>
    %33 = arith.addf %30, %32 : vector<16x128xf32>
    %34 = arith.addf %1, %33 : vector<16x128xf32>
    %35 = vector.shape_cast %34 : vector<16x128xf32> to vector<1x16x128xf32>
    %c0_19 = arith.constant 0 : index
    %c0_20 = arith.constant 0 : index
    %c0_21 = arith.constant 0 : index
    %36 = vector.load %arg6[%c0_19, %c0_20, %c0_21] : memref<1x16x128xf32, #tpu.memory_space<vmem>>, vector<1x16x128xf32>
    tpu.vector_store %arg6[%c0_19, %c0_20, %c0_21], %35 {strides = array<i32>} : memref<1x16x128xf32, #tpu.memory_space<vmem>>, vector<1x16x128xf32>,
    return
  }
  func.func @transform_0(%arg0: i32) -> (i32, i32, i32) {
    %c0_i32 = arith.constant 0 : i32
    %c0_i32_0 = arith.constant 0 : i32
    %c0_i32_1 = arith.constant 0 : i32
    return %arg0, %c0_i32, %c0_i32_0 : i32, i32, i32
  }
  func.func @transform_1(%arg0: i32) -> (i32, i32) {
    %c0_i32 = arith.constant 0 : i32
    %c0_i32_0 = arith.constant 0 : i32
    %c0_i32_1 = arith.constant 0 : i32
    return %c0_i32, %c0_i32_0 : i32, i32
  }
  func.func @transform_2(%arg0: i32) -> (i32, i32) {
    %c0_i32 = arith.constant 0 : i32
    %c0_i32_0 = arith.constant 0 : i32
    %c0_i32_1 = arith.constant 0 : i32
    return %c0_i32, %c0_i32_0 : i32, i32
  }
  func.func @transform_3(%arg0: i32) -> (i32, i32) {
    %c0_i32 = arith.constant 0 : i32
    %c0_i32_0 = arith.constant 0 : i32
    %c0_i32_1 = arith.constant 0 : i32
    return %c0_i32, %c0_i32_0 : i32, i32
  }
  func.func @transform_4(%arg0: i32) -> (i32, i32) {
    %c0_i32 = arith.constant 0 : i32
    %c0_i32_0 = arith.constant 0 : i32
    %c0_i32_1 = arith.constant 0 : i32
    return %c0_i32, %c0_i32_0 : i32, i32
  }
  func.func @transform_5(%arg0: i32) -> (i32, i32, i32) {
    %c0_i32 = arith.constant 0 : i32
    %c0_i32_0 = arith.constant 0 : i32
    %c0_i32_1 = arith.constant 0 : i32
    return %arg0, %c0_i32, %c0_i32_0 : i32, i32, i32
  }
}

</mosaic_0001>

<llo_original>
// kernel: tpu_custom_call.1
$region0: #{tpu_custom_call.1}
  #allocation0 [shape = 'u32[]', space=smem, size = 0x4, offset = 0x4, fixed_abs, tag = 'smem constant byte address 0x4 - core index']
  #allocation1 [shape = 'u32[144,128]{1,0:T(1,128)}', space=vmem, size = 0x12000, scoped, tag = 'internal scratch']
  %s0 = inlined_call_operand.hbm [shape: f32[2,16,128], index: 0, kind: input, shape index: {}]
  %s1 = inlined_call_operand.hbm [shape: f32[384,128], index: 1, kind: input, shape index: {}]
  %s2 = inlined_call_operand.vmem [shape: f32[1,128], index: 2, kind: input, shape index: {}]
  %s3 = inlined_call_operand.hbm [shape: f32[384,128], index: 3, kind: input, shape index: {}]
  %s4 = inlined_call_operand.vmem [shape: f32[1,128], index: 4, kind: input, shape index: {}]
  %s5 = inlined_call_operand.hbm [shape: f32[2,16,128], index: 5, kind: output, shape index: {}]
  %s6 = sld [smem:[#allocation0]]
  $region65: #{tpu_custom_call.1} parent=0
    _
  %s8 = ssub.s32 1, %s6
  %s9 = scalar_select 0, %s8, %s6
  $region1: #{tpu_custom_call.1} parent=0
    #allocation2 [shape = 'u8[16384]{0}', space=vmem, size = 0x4000, scoped, tag = 'input window, operand 0']
    #allocation3 [shape = 's32[2]{0}', space=sflag, size = 0x8, scoped, tag = 'scoped memory for tpu_custom_call.1']
    #allocation4 [shape = 's32[2]{0}', space=sflag, size = 0x8, scoped, tag = 'scoped memory for tpu_custom_call.1']
    #allocation5 [shape = 'u8[196608]{0}', space=vmem, size = 0x30000, scoped, tag = 'input window, operand 1, single buffered']
    #allocation6 [shape = 's32[1]{0}', space=sflag, size = 0x4, scoped, tag = 'scoped memory for tpu_custom_call.1']
    #allocation7 [shape = 'u8[196608]{0}', space=vmem, size = 0x30000, scoped, tag = 'input window, operand 3, single buffered']
    #allocation8 [shape = 'u8[16384]{0}', space=vmem, size = 0x4000, scoped, tag = 'output window, operand 0']
    %10 = vsyncpa [#allocation3], 0
    %s11 = scalar_lea.sflag [#allocation3], 1
    %12 = vsyncpa %s11, 0
    %13 = vsyncpa [#allocation6], 0
    %14 = vsyncpa [#allocation4], 0
    %s15 = scalar_lea.sflag [#allocation4], 1
    %16 = vsyncpa %s15, 0
    loop: start=0, step=1, limit=4
    $region2: #{tpu_custom_call.1} parent=1 // loop_pre_header
      _
    $region3: #{tpu_custom_call.1} parent=1 // loop_header
      %s18 = sphi 0, %s22
      %p19 = scmp.ge.s32.totalorder %s18, 4
      %s28 = sphi 0, %s30
      %s31 = sphi 0, %s28
      %s32 = sphi 0, %s31
      %s48 = sphi 0, %s32
      %s52 = sphi 0, %s52
      %s54 = sphi 0, %s52
      %s55 = sphi 0, %s54
      %s69 = sphi 0, %s55
      %s73 = sphi 0, %s73
      %s75 = sphi 0, %s73
      %s76 = sphi 0, %s75
      %s90 = sphi 0, %s76
      %s94 = sphi 0, %s94
      %s96 = sphi 0, %s94
      %s97 = sphi 0, %s96
      %s111 = sphi 0, %s97
      %s115 = sphi 0, %s115
      %s117 = sphi 0, %s115
      %s118 = sphi 0, %s117
      %s132 = sphi 0, %s118
      %s138 = sphi 0, %s140
      %s141 = sphi 0, %s138
      %s142 = sphi 0, %s141
      %s158 = sphi 0, %s142
    $region4: #{tpu_custom_call.1} parent=1 // loop_header_branch
      %21 = sbr.rel (%p19) target = $region8
    $region5: #{tpu_custom_call.1} parent=1 // loop_body
      %s23 = ssub.s32 %s18, 1
      %s24 = ssub.s32 %s18, 2
      %s25 = sadd.s32 %s18, 1
      %s26 = ssub.s32 %s18, %s25
      %p27 = scmp.eq.s32.totalorder %s26, 0
      %s29 = sadd.s32 %s28, 1
      %s30 = scalar_select %p27, %s28, %s29
      %p33 = pneg %p27
      %p34 = scmp.eq.s32.totalorder %s18, 1
      %p35 = por %p33, %p34
      %p36 = scmp.ne.s32.totalorder %s28, %s31
      %p37 = scmp.eq.s32.totalorder %s18, 0
      %p38 = por %p36, %p37
      %p39 = scmp.ne.s32.totalorder %s28, %s31
      %p40 = scmp.eq.s32.totalorder %s23, 1
      %p41 = por %p39, %p40
      %p42 = scmp.ne.s32.totalorder %s31, %s32
      %p43 = scmp.eq.s32.totalorder %s23, 0
      %p44 = por %p42, %p43
      %p45 = scmp.ne.s32.totalorder %s31, %s32
      %p46 = scmp.eq.s32.totalorder %s24, 1
      %p47 = por %p45, %p46
      %p49 = scmp.ne.s32.totalorder %s32, %s48
      %p50 = scmp.eq.s32.totalorder %s24, 0
      %p51 = por %p49, %p50
      %s53 = sadd.s32 %s52, 1
      %p56 = scmp.eq.s32.totalorder %s18, 1
      %p57 = scmp.ne.s32.totalorder %s52, %s54
      %p58 = scmp.eq.s32.totalorder %s18, 0
      %p59 = por %p57, %p58
      %p60 = scmp.ne.s32.totalorder %s52, %s54
      %p61 = scmp.eq.s32.totalorder %s23, 1
      %p62 = por %p60, %p61
      %p63 = scmp.ne.s32.totalorder %s54, %s55
      %p64 = scmp.eq.s32.totalorder %s23, 0
      %p65 = por %p63, %p64
      %p66 = scmp.ne.s32.totalorder %s54, %s55
      %p67 = scmp.eq.s32.totalorder %s24, 1
      %p68 = por %p66, %p67
      %p70 = scmp.ne.s32.totalorder %s55, %s69
      %p71 = scmp.eq.s32.totalorder %s24, 0
      %p72 = por %p70, %p71
      %s74 = sadd.s32 %s73, 1
      %p77 = scmp.eq.s32.totalorder %s18, 1
      %p78 = scmp.ne.s32.totalorder %s73, %s75
      %p79 = scmp.eq.s32.totalorder %s18, 0
      %p80 = por %p78, %p79
      %p81 = scmp.ne.s32.totalorder %s73, %s75
      %p82 = scmp.eq.s32.totalorder %s23, 1
      %p83 = por %p81, %p82
      %p84 = scmp.ne.s32.totalorder %s75, %s76
      %p85 = scmp.eq.s32.totalorder %s23, 0
      %p86 = por %p84, %p85
      %p87 = scmp.ne.s32.totalorder %s75, %s76
      %p88 = scmp.eq.s32.totalorder %s24, 1
      %p89 = por %p87, %p88
      %p91 = scmp.ne.s32.totalorder %s76, %s90
      %p92 = scmp.eq.s32.totalorder %s24, 0
      %p93 = por %p91, %p92
      %s95 = sadd.s32 %s94, 1
      %p98 = scmp.eq.s32.totalorder %s18, 1
      %p99 = scmp.ne.s32.totalorder %s94, %s96
      %p100 = scmp.eq.s32.totalorder %s18, 0
      %p101 = por %p99, %p100
      %p102 = scmp.ne.s32.totalorder %s94, %s96
      %p103 = scmp.eq.s32.totalorder %s23, 1
      %p104 = por %p102, %p103
      %p105 = scmp.ne.s32.totalorder %s96, %s97
      %p106 = scmp.eq.s32.totalorder %s23, 0
      %p107 = por %p105, %p106
      %p108 = scmp.ne.s32.totalorder %s96, %s97
      %p109 = scmp.eq.s32.totalorder %s24, 1
      %p110 = por %p108, %p109
      %p112 = scmp.ne.s32.totalorder %s97, %s111
      %p113 = scmp.eq.s32.totalorder %s24, 0
      %p114 = por %p112, %p113
      %s116 = sadd.s32 %s115, 1
      %p119 = scmp.eq.s32.totalorder %s18, 1
      %p120 = scmp.ne.s32.totalorder %s115, %s117
      %p121 = scmp.eq.s32.totalorder %s18, 0
      %p122 = por %p120, %p121
      %p123 = scmp.ne.s32.totalorder %s115, %s117
      %p124 = scmp.eq.s32.totalorder %s23, 1
      %p125 = por %p123, %p124
      %p126 = scmp.ne.s32.totalorder %s117, %s118
      %p127 = scmp.eq.s32.totalorder %s23, 0
      %p128 = por %p126, %p127
      %p129 = scmp.ne.s32.totalorder %s117, %s118
      %p130 = scmp.eq.s32.totalorder %s24, 1
      %p131 = por %p129, %p130
      %p133 = scmp.ne.s32.totalorder %s118, %s132
      %p134 = scmp.eq.s32.totalorder %s24, 0
      %p135 = por %p133, %p134
      %s136 = ssub.s32 %s18, %s25
      %p137 = scmp.eq.s32.totalorder %s136, 0
      %s139 = sadd.s32 %s138, 1
      %s140 = scalar_select %p137, %s138, %s139
      %p143 = pneg %p137
      %p144 = scmp.eq.s32.totalorder %s18, 1
      %p145 = por %p143, %p144
      %p146 = scmp.ne.s32.totalorder %s138, %s141
      %p147 = scmp.eq.s32.totalorder %s18, 0
      %p148 = por %p146, %p147
      %p149 = scmp.ne.s32.totalorder %s138, %s141
      %p150 = scmp.eq.s32.totalorder %s23, 1
      %p151 = por %p149, %p150
      %p152 = scmp.ne.s32.totalorder %s141, %s142
      %p153 = scmp.eq.s32.totalorder %s23, 0
      %p154 = por %p152, %p153
      %p155 = scmp.ne.s32.totalorder %s141, %s142
      %p156 = scmp.eq.s32.totalorder %s24, 1
      %p157 = por %p155, %p156
      %p159 = scmp.ne.s32.totalorder %s142, %s158
      %p160 = scmp.eq.s32.totalorder %s24, 0
      %p161 = por %p159, %p160
      %p162 = scmp.le.s32.totalorder 1, %s18
      %p163 = scmp.lt.s32.totalorder %s18, 3
      %p164 = pnand %p162, %p163
      %p165 = pneg %p164
      // Predicated region
      $region9: #{tpu_custom_call.1} parent=5 // pred_check
        _
      $region10: #{tpu_custom_call.1} parent=5 // pred_check_branch
        %167 = sbr.rel (%p164) target = $region12
      $region11: #{tpu_custom_call.1} parent=5 // pred_region
        %s168 = ssub.s32 %s18, 1
        // Predicated region
        $region13: #{tpu_custom_call.1} parent=11 // pred_check
          %p169 = pneg %p65
        $region14: #{tpu_custom_call.1} parent=11 // pred_check_branch
          %171 = sbr.rel (%p169) target = $region16
        $region15: #{tpu_custom_call.1} parent=11 // pred_region
          %s173 = ssub.s32 6144, 6144
          %174 = vsyncadd [#allocation6], %s173
          %s175 = sshll.u32 [#allocation5], 4
          %s176 = int_to_ptr.vmem [resolvable:$true] %s175
          %181 = dma.hbm_to_vmem [thread:$0]  %s1, 6144, %s176, [#allocation6], 128, 128, 8
        $region16: #{tpu_custom_call.1} parent=11 // pred_fallthru
          _
        // Predicated region
        $region17: #{tpu_custom_call.1} parent=11 // pred_check
          %p182 = pneg %p86
        $region18: #{tpu_custom_call.1} parent=11 // pred_check_branch
          %184 = sbr.rel (%p182) target = $region20
        $region19: #{tpu_custom_call.1} parent=11 // pred_region
          _
        $region20: #{tpu_custom_call.1} parent=11 // pred_fallthru
          _
        // Predicated region
        $region21: #{tpu_custom_call.1} parent=11 // pred_check
          %p185 = pneg %p107
        $region22: #{tpu_custom_call.1} parent=11 // pred_check_branch
          %187 = sbr.rel (%p185) target = $region24
        $region23: #{tpu_custom_call.1} parent=11 // pred_region
          %s189 = ssub.s32 6144, 6144
          %190 = vsyncadd [#allocation6], %s189
          %s191 = sshll.u32 [#allocation7], 4
          %s192 = int_to_ptr.vmem [resolvable:$true] %s191
          %197 = dma.hbm_to_vmem [thread:$0]  %s3, 6144, %s192, [#allocation6], 128, 128, 8
        $region24: #{tpu_custom_call.1} parent=11 // pred_fallthru
          _
        // Predicated region
        $region25: #{tpu_custom_call.1} parent=11 // pred_check
          %p198 = pneg %p128
        $region26: #{tpu_custom_call.1} parent=11 // pred_check_branch
          %200 = sbr.rel (%p198) target = $region28
        $region27: #{tpu_custom_call.1} parent=11 // pred_region
          _
        $region28: #{tpu_custom_call.1} parent=11 // pred_fallthru
          _
      $region12: #{tpu_custom_call.1} parent=5 // pred_fallthru
        _
      %p201 = scmp.lt.s32.totalorder %s18, 2
      // Predicated region
      $region29: #{tpu_custom_call.1} parent=5 // pred_check
        %p202 = pneg %p201
      $region30: #{tpu_custom_call.1} parent=5 // pred_check_branch
        %204 = sbr.rel (%p202) target = $region32
      $region31: #{tpu_custom_call.1} parent=5 // pred_region
        // Predicated region
        $region33: #{tpu_custom_call.1} parent=31 // pred_check
          %p205 = pneg %p38
        $region34: #{tpu_custom_call.1} parent=31 // pred_check_branch
          %207 = sbr.rel (%p205) target = $region36
        $region35: #{tpu_custom_call.1} parent=31 // pred_region
          %s208 = sand.u32 %s28, 1
          %s209 = scalar_lea.sflag [#allocation3], %s208
          %s210 = sand.u32 %s28, 1
          %s211 = smul.addr %s210, 16
          %s212 = scalar_lea.vmem [#allocation2], %s211
          %s214 = ssub.s32 256, 256
          %215 = vsyncadd %s209, %s214
          %s216 = smul.addr %s18, 2
          %s217 = smul.addr %s216, 128
          %s218 = scalar_lea.hbm %s0, %s217
          %s219 = sshll.u32 %s212, 4
          %s220 = int_to_ptr.vmem [resolvable:$true] %s219
          %225 = dma.hbm_to_vmem [thread:$0]  %s218, 256, %s220, %s209, 128, 128, 8
        $region36: #{tpu_custom_call.1} parent=31 // pred_fallthru
          _
      $region32: #{tpu_custom_call.1} parent=5 // pred_fallthru
        _
      %p226 = scmp.le.s32.totalorder 1, %s18
      %p227 = scmp.lt.s32.totalorder %s18, 3
      %p228 = pnand %p226, %p227
      %p229 = pneg %p228
      // Predicated region
      $region37: #{tpu_custom_call.1} parent=5 // pred_check
        _
      $region38: #{tpu_custom_call.1} parent=5 // pred_check_branch
        %231 = sbr.rel (%p228) target = $region40
      $region39: #{tpu_custom_call.1} parent=5 // pred_region
        %s232 = ssub.s32 %s18, 1
        %s233 = sand.u32 %s31, 1
        %s234 = scalar_lea.sflag [#allocation3], %s233
        %s235 = sand.u32 %s31, 1
        %s236 = smul.addr %s235, 16
        %s237 = scalar_lea.vmem [#allocation2], %s236
        // Predicated region
        $region41: #{tpu_custom_call.1} parent=39 // pred_check
          %p238 = pneg %p44
        $region42: #{tpu_custom_call.1} parent=39 // pred_check_branch
          %240 = sbr.rel (%p238) target = $region44
        $region43: #{tpu_custom_call.1} parent=39 // pred_region
          %241 = dma.done %s234, 256
        $region44: #{tpu_custom_call.1} parent=39 // pred_fallthru
          _
        // Predicated region
        $region45: #{tpu_custom_call.1} parent=39 // pred_check
          %p242 = pneg %p65
        $region46: #{tpu_custom_call.1} parent=39 // pred_check_branch
          %244 = sbr.rel (%p242) target = $region48
        $region47: #{tpu_custom_call.1} parent=39 // pred_region
          %245 = dma.done [#allocation6], 6144
        $region48: #{tpu_custom_call.1} parent=39 // pred_fallthru
          _
        // Predicated region
        $region49: #{tpu_custom_call.1} parent=39 // pred_check
          %p246 = pneg %p107
        $region50: #{tpu_custom_call.1} parent=39 // pred_check_branch
          %248 = sbr.rel (%p246) target = $region52
        $region51: #{tpu_custom_call.1} parent=39 // pred_region
          %249 = dma.done [#allocation6], 6144
        $region52: #{tpu_custom_call.1} parent=39 // pred_fallthru
          _
        %s250 = sand.u32 %s31, 1
        %s251 = scalar_lea.sflag [#allocation3], %s250
        %s252 = sand.u32 %s31, 1
        %s253 = smul.addr %s252, 16
        %s254 = scalar_lea.vmem [#allocation2], %s253
        %p255 = pneg %p44
        %p256 = pneg %p41
        %p257 = pneg %p65
        %p258 = pneg %p62
        %p259 = pneg %p86
        %p260 = pneg %p83
        %p261 = pneg %p107
        %p262 = pneg %p104
        %p263 = pneg %p128
        %p264 = pneg %p125
        %p265 = pneg %p154
        %p266 = pneg %p151
        %s267 = sand.u32 %s141, 1
        %s268 = scalar_lea.sflag [#allocation4], %s267
        %s269 = sand.u32 %s141, 1
        %s270 = smul.addr %s269, 16
        %s271 = scalar_lea.vmem [#allocation8], %s270
        %v272 = vld [vmem:[%s237] sm:$0xff]
        %v273 = vld [vmem:[%s237 + $0x8] sm:$0xff]
        %v274 = vlaneseq
        %v275 = vshrl.u32 %v274, 7
        %v276 = vadd.s32 %v275, 8
        %vm277 = vcmp.eq.s32.totalorder %v275, 0
        %vm278 = vcmp.eq.s32.totalorder %v276, 0
        %vm279 = vcmp.eq.s32.totalorder %v275, 15
        %vm280 = vcmp.eq.s32.totalorder %v276, 15
        %v281 = vrot.slane %v272, 7
        %v282 = vrot.slane %v273, 7
        %vm283 = vcmp.lt.s32.totalorder %v275, 1
        %v284 = vsel %vm283, %v281, %v282
        %v285 = vsel %vm283, %v282, %v281
        %v286 = vsel %vm277, 0.0, %v285
        %v287 = vsel %vm278, 0.0, %v284
        %v288 = vrot.slane %v272, 1
        %v289 = vrot.slane %v273, 1
        %vm290 = vcmp.lt.s32.totalorder %v275, 7
        %v291 = vsel %vm290, %v288, %v289
        %v292 = vsel %vm290, %v289, %v288
        %v293 = vsel %vm279, 0.0, %v291
        %v294 = vsel %vm280, 0.0, %v292
        %v295 = vld [vmem:[#allocation5] sm:$0xff]
        %v296 = vld [vmem:[#allocation5 + $0x8] sm:$0xff]
        %v297 = vld [vmem:[#allocation5 + $0x10] sm:$0xff]
        %v298 = vld [vmem:[#allocation5 + $0x18] sm:$0xff]
        %v299 = vld [vmem:[#allocation5 + $0x20] sm:$0xff]
        %v300 = vld [vmem:[#allocation5 + $0x28] sm:$0xff]
        %v301 = vld [vmem:[#allocation5 + $0x30] sm:$0xff]
        %v302 = vld [vmem:[#allocation5 + $0x38] sm:$0xff]
        %v303 = vld [vmem:[#allocation5 + $0x40] sm:$0xff]
        %v304 = vld [vmem:[#allocation5 + $0x48] sm:$0xff]
        %v305 = vld [vmem:[#allocation5 + $0x50] sm:$0xff]
        %v306 = vld [vmem:[#allocation5 + $0x58] sm:$0xff]
        %v307 = vld [vmem:[#allocation5 + $0x60] sm:$0xff]
        %v308 = vld [vmem:[#allocation5 + $0x68] sm:$0xff]
        %v309 = vld [vmem:[#allocation5 + $0x70] sm:$0xff]
        %v310 = vld [vmem:[#allocation5 + $0x78] sm:$0xff]
        %v311 = vld [vmem:[#allocation5 + $0x80] sm:$0xff]
        %v312 = vld [vmem:[#allocation5 + $0x88] sm:$0xff]
        %v313 = vld [vmem:[#allocation5 + $0x90] sm:$0xff]
        %v314 = vld [vmem:[#allocation5 + $0x98] sm:$0xff]
        %v315 = vld [vmem:[#allocation5 + $0xa0] sm:$0xff]
        %v316 = vld [vmem:[#allocation5 + $0xa8] sm:$0xff]
        %v317 = vld [vmem:[#allocation5 + $0xb0] sm:$0xff]
        %v318 = vld [vmem:[#allocation5 + $0xb8] sm:$0xff]
        %v319 = vld [vmem:[#allocation5 + $0xc0] sm:$0xff]
        %v320 = vld [vmem:[#allocation5 + $0xc8] sm:$0xff]
        %v321 = vld [vmem:[#allocation5 + $0xd0] sm:$0xff]
        %v322 = vld [vmem:[#allocation5 + $0xd8] sm:$0xff]
        %v323 = vld [vmem:[#allocation5 + $0xe0] sm:$0xff]
        %v324 = vld [vmem:[#allocation5 + $0xe8] sm:$0xff]
        %v325 = vld [vmem:[#allocation5 + $0xf0] sm:$0xff]
        %v326 = vld [vmem:[#allocation5 + $0xf8] sm:$0xff]
        %v327 = vld [vmem:[#allocation5 + $0x100] sm:$0xff]
        %v328 = vld [vmem:[#allocation5 + $0x108] sm:$0xff]
        %v329 = vld [vmem:[#allocation5 + $0x110] sm:$0xff]
        %v330 = vld [vmem:[#allocation5 + $0x118] sm:$0xff]
        %v331 = vld [vmem:[#allocation5 + $0x120] sm:$0xff]
        %v332 = vld [vmem:[#allocation5 + $0x128] sm:$0xff]
        %v333 = vld [vmem:[#allocation5 + $0x130] sm:$0xff]
        %v334 = vld [vmem:[#allocation5 + $0x138] sm:$0xff]
        %v335 = vld [vmem:[#allocation5 + $0x140] sm:$0xff]
        %v336 = vld [vmem:[#allocation5 + $0x148] sm:$0xff]
        %v337 = vld [vmem:[#allocation5 + $0x150] sm:$0xff]
        %v338 = vld [vmem:[#allocation5 + $0x158] sm:$0xff]
        %v339 = vld [vmem:[#allocation5 + $0x160] sm:$0xff]
        %v340 = vld [vmem:[#allocation5 + $0x168] sm:$0xff]
        %v341 = vld [vmem:[#allocation5 + $0x170] sm:$0xff]
        %v342 = vld [vmem:[#allocation5 + $0x178] sm:$0xff]
        %v343 = vld [vmem:[%s2] sm:$0x1]
        %v345 = vlaneseq
        %v346 = vshrl.u32 %v345, 7
        %v347 = vsub.s32 0, %v346
        %v348 = vrot.slane %v343, %v347
        %350 = vmatprep.subr.mxu0 0.0
        %351 = vmatpush1.msra.mxu0 %v295
        %352 = vmatprep.subr.mxu0 0.0
        %353 = vmatpush1.msra.mxu0 %v296
        %354 = vmatprep.subr.mxu0 0.0
        %355 = vmatpush1.msra.mxu0 %v297
        %356 = vmatprep.subr.mxu0 0.0
        %357 = vmatpush1.msra.mxu0 %v298
        %358 = vmatprep.subr.mxu0 0.0
        %359 = vmatpush1.msra.mxu0 %v299
        %360 = vmatprep.subr.mxu0 0.0
        %361 = vmatpush1.msra.mxu0 %v300
        %362 = vmatprep.subr.mxu0 0.0
        %363 = vmatpush1.msra.mxu0 %v301
        %364 = vmatprep.subr.mxu0 0.0
        %365 = vmatpush1.msra.mxu0 %v302
        %366 = vmatprep.subr.mxu0 0.0
        %367 = vmatpush1.msra.mxu0 %v303
        %368 = vmatprep.subr.mxu0 0.0
        %369 = vmatpush1.msra.mxu0 %v304
        %370 = vmatprep.subr.mxu0 0.0
        %371 = vmatpush1.msra.mxu0 %v305
        %372 = vmatprep.subr.mxu0 0.0
        %373 = vmatpush1.msra.mxu0 %v306
        %374 = vmatprep.subr.mxu0 0.0
        %375 = vmatpush1.msra.mxu0 %v307
        %376 = vmatprep.subr.mxu0 0.0
        %377 = vmatpush1.msra.mxu0 %v308
        %378 = vmatprep.subr.mxu0 0.0
        %379 = vmatpush1.msra.mxu0 %v309
        %380 = vmatprep.subr.mxu0 0.0
        %381 = vmatpush1.msra.mxu0 %v310
        %382 = vmatprep.subr.mxu0 0.0
        %383 = vmatpush1.msra.mxu0 %v311
        %384 = vmatprep.subr.mxu0 0.0
        %385 = vmatpush1.msra.mxu0 %v312
        %386 = vmatprep.subr.mxu0 0.0
        %387 = vmatpush1.msra.mxu0 %v313
        %388 = vmatprep.subr.mxu0 0.0
        %389 = vmatpush1.msra.mxu0 %v314
        %390 = vmatprep.subr.mxu0 0.0
        %391 = vmatpush1.msra.mxu0 %v315
        %392 = vmatprep.subr.mxu0 0.0
        %393 = vmatpush1.msra.mxu0 %v316
        %394 = vmatprep.subr.mxu0 0.0
        %395 = vmatpush1.msra.mxu0 %v317
        %396 = vmatprep.subr.mxu0 0.0
        %397 = vmatpush1.msra.mxu0 %v318
        %398 = vmatprep.subr.mxu0 0.0
        %399 = vmatpush1.msra.mxu0 %v319
        %400 = vmatprep.subr.mxu0 0.0
        %401 = vmatpush1.msra.mxu0 %v320
        %402 = vmatprep.subr.mxu0 0.0
        %403 = vmatpush1.msra.mxu0 %v321
        %404 = vmatprep.subr.mxu0 0.0
        %405 = vmatpush1.msra.mxu0 %v322
        %406 = vmatprep.subr.mxu0 0.0
        %407 = vmatpush1.msra.mxu0 %v323
        %408 = vmatprep.subr.mxu0 0.0
        %409 = vmatpush1.msra.mxu0 %v324
        %410 = vmatprep.subr.mxu0 0.0
        %411 = vmatpush1.msra.mxu0 %v325
        %412 = vmatprep.subr.mxu0 0.0
        %413 = vmatpush1.msra.mxu0 %v326
        %414 = vmatprep.mubr.f32.mxu0 %v272
        %415 = vmatmul.mubr.f32.gmra.mrb[0].mxu0 %v286
        %v416 = vpop.f32.mrb[0].mxu0
        %v417 = vadd.f32 %v348, %v416
        %v418 = vpop.f32.mrb[0].mxu0
        %419 = vmatprep.mubr.f32.mxu0 %v273
        %420 = vmatmul.mubr.f32.gmra.mrb[0].mxu0 %v287
        %v421 = vpop.f32.mrb[0].mxu0
        %v422 = vadd.f32 %v348, %v421
        %v423 = vpop.f32.mrb[0].mxu0
        %424 = vdwg.mxu0
        %425 = vmatprep.subr.mxu0 0.0
        %426 = vmatpush1.msra.mxu0 %v327
        %427 = vmatprep.subr.mxu0 0.0
        %428 = vmatpush1.msra.mxu0 %v328
        %429 = vmatprep.subr.mxu0 0.0
        %430 = vmatpush1.msra.mxu0 %v329
        %431 = vmatprep.subr.mxu0 0.0
        %432 = vmatpush1.msra.mxu0 %v330
        %433 = vmatprep.subr.mxu0 0.0
        %434 = vmatpush1.msra.mxu0 %v331
        %435 = vmatprep.subr.mxu0 0.0
        %436 = vmatpush1.msra.mxu0 %v332
        %437 = vmatprep.subr.mxu0 0.0
        %438 = vmatpush1.msra.mxu0 %v333
        %439 = vmatprep.subr.mxu0 0.0
        %440 = vmatpush1.msra.mxu0 %v334
        %441 = vmatprep.subr.mxu0 0.0
        %442 = vmatpush1.msra.mxu0 %v335
        %443 = vmatprep.subr.mxu0 0.0
        %444 = vmatpush1.msra.mxu0 %v336
        %445 = vmatprep.subr.mxu0 0.0
        %446 = vmatpush1.msra.mxu0 %v337
        %447 = vmatprep.subr.mxu0 0.0
        %448 = vmatpush1.msra.mxu0 %v338
        %449 = vmatprep.subr.mxu0 0.0
        %450 = vmatpush1.msra.mxu0 %v339
        %451 = vmatprep.subr.mxu0 0.0
        %452 = vmatpush1.msra.mxu0 %v340
        %453 = vmatprep.subr.mxu0 0.0
        %454 = vmatpush1.msra.mxu0 %v341
        %455 = vmatprep.subr.mxu0 0.0
        %456 = vmatpush1.msra.mxu0 %v342
        %457 = vmatprep.subr.mxu0 0.0
        %458 = vmatpush1.msra.mxu0 0.0
        %459 = vmatprep.subr.mxu0 0.0
        %460 = vmatpush1.msra.mxu0 0.0
        %461 = vmatprep.subr.mxu0 0.0
        %462 = vmatpush1.msra.mxu0 0.0
        %463 = vmatprep.subr.mxu0 0.0
        %464 = vmatpush1.msra.mxu0 0.0
        %465 = vmatprep.subr.mxu0 0.0
        %466 = vmatpush1.msra.mxu0 0.0
        %467 = vmatprep.subr.mxu0 0.0
        %468 = vmatpush1.msra.mxu0 0.0
        %469 = vmatprep.subr.mxu0 0.0
        %470 = vmatpush1.msra.mxu0 0.0
        %471 = vmatprep.subr.mxu0 0.0
        %472 = vmatpush1.msra.mxu0 0.0
        %473 = vmatprep.subr.mxu0 0.0
        %474 = vmatpush1.msra.mxu0 0.0
        %475 = vmatprep.subr.mxu0 0.0
        %476 = vmatpush1.msra.mxu0 0.0
        %477 = vmatprep.subr.mxu0 0.0
        %478 = vmatpush1.msra.mxu0 0.0
        %479 = vmatprep.subr.mxu0 0.0
        %480 = vmatpush1.msra.mxu0 0.0
        %481 = vmatprep.subr.mxu0 0.0
        %482 = vmatpush1.msra.mxu0 0.0
        %483 = vmatprep.subr.mxu0 0.0
        %484 = vmatpush1.msra.mxu0 0.0
        %485 = vmatprep.subr.mxu0 0.0
        %486 = vmatpush1.msra.mxu0 0.0
        %487 = vmatprep.subr.mxu0 0.0
        %488 = vmatpush1.msra.mxu0 0.0
        %489 = vmatprep.mubr.f32.mxu0 0.0
        %490 = vmatmul.mubr.f32.gmra.mrb[0].mxu0 %v293
        %v491 = vpop.f32.mrb[0].mxu0
        %v492 = vadd.f32 %v417, %v491
        %v493 = vpop.f32.mrb[0].mxu0
        %494 = vmatprep.mubr.f32.mxu0 0.0
        %495 = vmatmul.mubr.f32.gmra.mrb[0].mxu0 %v294
        %v496 = vpop.f32.mrb[0].mxu0
        %v497 = vadd.f32 %v422, %v496
        %v498 = vpop.f32.mrb[0].mxu0
        %499 = vdwg.mxu0
        %v500 = vmax.f32 %v492, 0.0
        %v501 = vmax.f32 %v497, 0.0
        %v502 = vrot.slane %v500, 7
        %v503 = vrot.slane %v501, 7
        %v504 = vsel %vm283, %v502, %v503
        %v505 = vsel %vm283, %v503, %v502
        %v506 = vsel %vm277, 0.0, %v505
        %v507 = vsel %vm278, 0.0, %v504
        %v508 = vrot.slane %v500, 1
        %v509 = vrot.slane %v501, 1
        %v510 = vsel %vm290, %v508, %v509
        %v511 = vsel %vm290, %v509, %v508
        %v512 = vsel %vm279, 0.0, %v510
        %v513 = vsel %vm280, 0.0, %v511
        %v514 = vld [vmem:[#allocation7] sm:$0xff]
        %v515 = vld [vmem:[#allocation7 + $0x8] sm:$0xff]
        %v516 = vld [vmem:[#allocation7 + $0x10] sm:$0xff]
        %v517 = vld [vmem:[#allocation7 + $0x18] sm:$0xff]
        %v518 = vld [vmem:[#allocation7 + $0x20] sm:$0xff]
        %v519 = vld [vmem:[#allocation7 + $0x28] sm:$0xff]
        %v520 = vld [vmem:[#allocation7 + $0x30] sm:$0xff]
        %v521 = vld [vmem:[#allocation7 + $0x38] sm:$0xff]
        %v522 = vld [vmem:[#allocation7 + $0x40] sm:$0xff]
        %v523 = vld [vmem:[#allocation7 + $0x48] sm:$0xff]
        %v524 = vld [vmem:[#allocation7 + $0x50] sm:$0xff]
        %v525 = vld [vmem:[#allocation7 + $0x58] sm:$0xff]
        %v526 = vld [vmem:[#allocation7 + $0x60] sm:$0xff]
        %v527 = vld [vmem:[#allocation7 + $0x68] sm:$0xff]
        %v528 = vld [vmem:[#allocation7 + $0x70] sm:$0xff]
        %v529 = vld [vmem:[#allocation7 + $0x78] sm:$0xff]
        %v530 = vld [vmem:[#allocation7 + $0x80] sm:$0xff]
        %v531 = vld [vmem:[#allocation7 + $0x88] sm:$0xff]
        %v532 = vld [vmem:[#allocation7 + $0x90] sm:$0xff]
        %v533 = vld [vmem:[#allocation7 + $0x98] sm:$0xff]
        %v534 = vld [vmem:[#allocation7 + $0xa0] sm:$0xff]
        %v535 = vld [vmem:[#allocation7 + $0xa8] sm:$0xff]
        %v536 = vld [vmem:[#allocation7 + $0xb0] sm:$0xff]
        %v537 = vld [vmem:[#allocation7 + $0xb8] sm:$0xff]
        %v538 = vld [vmem:[#allocation7 + $0xc0] sm:$0xff]
        %v539 = vld [vmem:[#allocation7 + $0xc8] sm:$0xff]
        %v540 = vld [vmem:[#allocation7 + $0xd0] sm:$0xff]
        %v541 = vld [vmem:[#allocation7 + $0xd8] sm:$0xff]
        %v542 = vld [vmem:[#allocation7 + $0xe0] sm:$0xff]
        %v543 = vld [vmem:[#allocation7 + $0xe8] sm:$0xff]
        %v544 = vld [vmem:[#allocation7 + $0xf0] sm:$0xff]
        %v545 = vld [vmem:[#allocation7 + $0xf8] sm:$0xff]
        %v546 = vld [vmem:[#allocation7 + $0x100] sm:$0xff]
        %v547 = vld [vmem:[#allocation7 + $0x108] sm:$0xff]
        %v548 = vld [vmem:[#allocation7 + $0x110] sm:$0xff]
        %v549 = vld [vmem:[#allocation7 + $0x118] sm:$0xff]
        %v550 = vld [vmem:[#allocation7 + $0x120] sm:$0xff]
        %v551 = vld [vmem:[#allocation7 + $0x128] sm:$0xff]
        %v552 = vld [vmem:[#allocation7 + $0x130] sm:$0xff]
        %v553 = vld [vmem:[#allocation7 + $0x138] sm:$0xff]
        %v554 = vld [vmem:[#allocation7 + $0x140] sm:$0xff]
        %v555 = vld [vmem:[#allocation7 + $0x148] sm:$0xff]
        %v556 = vld [vmem:[#allocation7 + $0x150] sm:$0xff]
        %v557 = vld [vmem:[#allocation7 + $0x158] sm:$0xff]
        %v558 = vld [vmem:[#allocation7 + $0x160] sm:$0xff]
        %v559 = vld [vmem:[#allocation7 + $0x168] sm:$0xff]
        %v560 = vld [vmem:[#allocation7 + $0x170] sm:$0xff]
        %v561 = vld [vmem:[#allocation7 + $0x178] sm:$0xff]
        %v562 = vld [vmem:[%s4] sm:$0x1]
        %v564 = vlaneseq
        %v565 = vshrl.u32 %v564, 7
        %v566 = vsub.s32 0, %v565
        %v567 = vrot.slane %v562, %v566
        %569 = vmatprep.subr.mxu0 0.0
        %570 = vmatpush1.msra.mxu0 %v514
        %571 = vmatprep.subr.mxu0 0.0
        %572 = vmatpush1.msra.mxu0 %v515
        %573 = vmatprep.subr.mxu0 0.0
        %574 = vmatpush1.msra.mxu0 %v516
        %575 = vmatprep.subr.mxu0 0.0
        %576 = vmatpush1.msra.mxu0 %v517
        %577 = vmatprep.subr.mxu0 0.0
        %578 = vmatpush1.msra.mxu0 %v518
        %579 = vmatprep.subr.mxu0 0.0
        %580 = vmatpush1.msra.mxu0 %v519
        %581 = vmatprep.subr.mxu0 0.0
        %582 = vmatpush1.msra.mxu0 %v520
        %583 = vmatprep.subr.mxu0 0.0
        %584 = vmatpush1.msra.mxu0 %v521
        %585 = vmatprep.subr.mxu0 0.0
        %586 = vmatpush1.msra.mxu0 %v522
        %587 = vmatprep.subr.mxu0 0.0
        %588 = vmatpush1.msra.mxu0 %v523
        %589 = vmatprep.subr.mxu0 0.0
        %590 = vmatpush1.msra.mxu0 %v524
        %591 = vmatprep.subr.mxu0 0.0
        %592 = vmatpush1.msra.mxu0 %v525
        %593 = vmatprep.subr.mxu0 0.0
        %594 = vmatpush1.msra.mxu0 %v526
        %595 = vmatprep.subr.mxu0 0.0
        %596 = vmatpush1.msra.mxu0 %v527
        %597 = vmatprep.subr.mxu0 0.0
        %598 = vmatpush1.msra.mxu0 %v528
        %599 = vmatprep.subr.mxu0 0.0
        %600 = vmatpush1.msra.mxu0 %v529
        %601 = vmatprep.subr.mxu0 0.0
        %602 = vmatpush1.msra.mxu0 %v530
        %603 = vmatprep.subr.mxu0 0.0
        %604 = vmatpush1.msra.mxu0 %v531
        %605 = vmatprep.subr.mxu0 0.0
        %606 = vmatpush1.msra.mxu0 %v532
        %607 = vmatprep.subr.mxu0 0.0
        %608 = vmatpush1.msra.mxu0 %v533
        %609 = vmatprep.subr.mxu0 0.0
        %610 = vmatpush1.msra.mxu0 %v534
        %611 = vmatprep.subr.mxu0 0.0
        %612 = vmatpush1.msra.mxu0 %v535
        %613 = vmatprep.subr.mxu0 0.0
        %614 = vmatpush1.msra.mxu0 %v536
        %615 = vmatprep.subr.mxu0 0.0
        %616 = vmatpush1.msra.mxu0 %v537
        %617 = vmatprep.subr.mxu0 0.0
        %618 = vmatpush1.msra.mxu0 %v538
        %619 = vmatprep.subr.mxu0 0.0
        %620 = vmatpush1.msra.mxu0 %v539
        %621 = vmatprep.subr.mxu0 0.0
        %622 = vmatpush1.msra.mxu0 %v540
        %623 = vmatprep.subr.mxu0 0.0
        %624 = vmatpush1.msra.mxu0 %v541
        %625 = vmatprep.subr.mxu0 0.0
        %626 = vmatpush1.msra.mxu0 %v542
        %627 = vmatprep.subr.mxu0 0.0
        %628 = vmatpush1.msra.mxu0 %v543
        %629 = vmatprep.subr.mxu0 0.0
        %630 = vmatpush1.msra.mxu0 %v544
        %631 = vmatprep.subr.mxu0 0.0
        %632 = vmatpush1.msra.mxu0 %v545
        %633 = vmatprep.mubr.f32.mxu0 %v500
        %634 = vmatmul.mubr.f32.gmra.mrb[0].mxu0 %v506
        %v635 = vpop.f32.mrb[0].mxu0
        %v636 = vadd.f32 %v567, %v635
        %v637 = vpop.f32.mrb[0].mxu0
        %638 = vmatprep.mubr.f32.mxu0 %v501
        %639 = vmatmul.mubr.f32.gmra.mrb[0].mxu0 %v507
        %v640 = vpop.f32.mrb[0].mxu0
        %v641 = vadd.f32 %v567, %v640
        %v642 = vpop.f32.mrb[0].mxu0
        %643 = vdwg.mxu0
        %644 = vmatprep.subr.mxu0 0.0
        %645 = vmatpush1.msra.mxu0 %v546
        %646 = vmatprep.subr.mxu0 0.0
        %647 = vmatpush1.msra.mxu0 %v547
        %648 = vmatprep.subr.mxu0 0.0
        %649 = vmatpush1.msra.mxu0 %v548
        %650 = vmatprep.subr.mxu0 0.0
        %651 = vmatpush1.msra.mxu0 %v549
        %652 = vmatprep.subr.mxu0 0.0
        %653 = vmatpush1.msra.mxu0 %v550
        %654 = vmatprep.subr.mxu0 0.0
        %655 = vmatpush1.msra.mxu0 %v551
        %656 = vmatprep.subr.mxu0 0.0
        %657 = vmatpush1.msra.mxu0 %v552
        %658 = vmatprep.subr.mxu0 0.0
        %659 = vmatpush1.msra.mxu0 %v553
        %660 = vmatprep.subr.mxu0 0.0
        %661 = vmatpush1.msra.mxu0 %v554
        %662 = vmatprep.subr.mxu0 0.0
        %663 = vmatpush1.msra.mxu0 %v555
        %664 = vmatprep.subr.mxu0 0.0
        %665 = vmatpush1.msra.mxu0 %v556
        %666 = vmatprep.subr.mxu0 0.0
        %667 = vmatpush1.msra.mxu0 %v557
        %668 = vmatprep.subr.mxu0 0.0
        %669 = vmatpush1.msra.mxu0 %v558
        %670 = vmatprep.subr.mxu0 0.0
        %671 = vmatpush1.msra.mxu0 %v559
        %672 = vmatprep.subr.mxu0 0.0
        %673 = vmatpush1.msra.mxu0 %v560
        %674 = vmatprep.subr.mxu0 0.0
        %675 = vmatpush1.msra.mxu0 %v561
        %676 = vmatprep.subr.mxu0 0.0
        %677 = vmatpush1.msra.mxu0 0.0
        %678 = vmatprep.subr.mxu0 0.0
        %679 = vmatpush1.msra.mxu0 0.0
        %680 = vmatprep.subr.mxu0 0.0
        %681 = vmatpush1.msra.mxu0 0.0
        %682 = vmatprep.subr.mxu0 0.0
        %683 = vmatpush1.msra.mxu0 0.0
        %684 = vmatprep.subr.mxu0 0.0
        %685 = vmatpush1.msra.mxu0 0.0
        %686 = vmatprep.subr.mxu0 0.0
        %687 = vmatpush1.msra.mxu0 0.0
        %688 = vmatprep.subr.mxu0 0.0
        %689 = vmatpush1.msra.mxu0 0.0
        %690 = vmatprep.subr.mxu0 0.0
        %691 = vmatpush1.msra.mxu0 0.0
        %692 = vmatprep.subr.mxu0 0.0
        %693 = vmatpush1.msra.mxu0 0.0
        %694 = vmatprep.subr.mxu0 0.0
        %695 = vmatpush1.msra.mxu0 0.0
        %696 = vmatprep.subr.mxu0 0.0
        %697 = vmatpush1.msra.mxu0 0.0
        %698 = vmatprep.subr.mxu0 0.0
        %699 = vmatpush1.msra.mxu0 0.0
        %700 = vmatprep.subr.mxu0 0.0
        %701 = vmatpush1.msra.mxu0 0.0
        %702 = vmatprep.subr.mxu0 0.0
        %703 = vmatpush1.msra.mxu0 0.0
        %704 = vmatprep.subr.mxu0 0.0
        %705 = vmatpush1.msra.mxu0 0.0
        %706 = vmatprep.subr.mxu0 0.0
        %707 = vmatpush1.msra.mxu0 0.0
        %708 = vmatprep.mubr.f32.mxu0 0.0
        %709 = vmatmul.mubr.f32.gmra.mrb[0].mxu0 %v512
        %v710 = vpop.f32.mrb[0].mxu0
        %v711 = vadd.f32 %v636, %v710
        %v712 = vpop.f32.mrb[0].mxu0
        %713 = vmatprep.mubr.f32.mxu0 0.0
        %714 = vmatmul.mubr.f32.gmra.mrb[0].mxu0 %v513
        %v715 = vpop.f32.mrb[0].mxu0
        %v716 = vadd.f32 %v641, %v715
        %v717 = vpop.f32.mrb[0].mxu0
        %718 = vdwg.mxu0
        %v719 = vadd.f32 %v272, %v711
        %v720 = vadd.f32 %v273, %v716
        %721 = vst [vmem:[%s271] sm:$0xff] %v719
        %722 = vst [vmem:[%s271 + $0x8] sm:$0xff] %v720
        %s723 = sand.u32 %s141, 1
        %s724 = scalar_lea.sflag [#allocation4], %s723
        %s725 = sand.u32 %s141, 1
        %s726 = smul.addr %s725, 16
        %s727 = scalar_lea.vmem [#allocation8], %s726
        // Predicated region
        $region53: #{tpu_custom_call.1} parent=39 // pred_check
          %p728 = pneg %p151
        $region54: #{tpu_custom_call.1} parent=39 // pred_check_branch
          %730 = sbr.rel (%p728) target = $region56
        $region55: #{tpu_custom_call.1} parent=39 // pred_region
          %s732 = ssub.s32 256, 256
          %733 = vsyncadd %s724, %s732
          %s734 = smul.addr %s23, 2
          %s735 = smul.addr %s734, 128
          %s736 = scalar_lea.hbm %s5, %s735
          %s737 = sshll.u32 %s727, 4
          %s738 = int_to_ptr.vmem [resolvable:$true] %s737
          %743 = dma.vmem_to_hbm [thread:$0]  %s738, 256, %s736, %s724, 128, 128, 8
        $region56: #{tpu_custom_call.1} parent=39 // pred_fallthru
          _
      $region40: #{tpu_custom_call.1} parent=5 // pred_fallthru
        _
      %p744 = scmp.le.s32.totalorder 2, %s18
      // Predicated region
      $region57: #{tpu_custom_call.1} parent=5 // pred_check
        %p745 = pneg %p744
      $region58: #{tpu_custom_call.1} parent=5 // pred_check_branch
        %747 = sbr.rel (%p745) target = $region60
      $region59: #{tpu_custom_call.1} parent=5 // pred_region
        %s748 = ssub.s32 %s18, 2
        // Predicated region
        $region61: #{tpu_custom_call.1} parent=59 // pred_check
          %p749 = pneg %p157
        $region62: #{tpu_custom_call.1} parent=59 // pred_check_branch
          %751 = sbr.rel (%p749) target = $region64
        $region63: #{tpu_custom_call.1} parent=59 // pred_region
          %s752 = sand.u32 %s142, 1
          %s753 = scalar_lea.sflag [#allocation4], %s752
          %s754 = sand.u32 %s142, 1
          %s755 = smul.addr %s754, 16
          %s756 = scalar_lea.vmem [#allocation8], %s755
          %757 = dma.done %s753, 256
        $region64: #{tpu_custom_call.1} parent=59 // pred_fallthru
          _
      $region60: #{tpu_custom_call.1} parent=5 // pred_fallthru
        _
    $region6: #{tpu_custom_call.1} parent=1 // loop_footer
      %s22 = sadd.s32 1, %s18
    $region7: #{tpu_custom_call.1} parent=1 // loop_footer_branch
      %17 = sbr.rel target = $region3
    $region8: #{tpu_custom_call.1} parent=1 // loop_exit
      _
    %758 = vsyncpa [#allocation3], 1
    %s759 = scalar_lea.sflag [#allocation3], 1
    %760 = vsyncpa %s759, 1
    %761 = vsyncpa [#allocation6], 1
    %762 = vsyncpa [#allocation4], 1
    %s763 = scalar_lea.sflag [#allocation4], 1
    %764 = vsyncpa %s763, 1

</llo_original>
